<compile_context>
chip_gen: v7x
topology: tpu7x:2x2x1
jax: 0.10.0
libtpu: 0.0.40
codegen_flags: <defaults>
</compile_context>

<pallas_src>
import jax
import jax.numpy as jnp
from jax.experimental import pallas as pl
from jax.experimental.pallas import tpu as pltpu


_VMEM_TILE_BYTES = 4 * 1024 * 1024    # per-buffer tile budget; double-buffered in+out <= 16 MiB
_VMEM_LIMIT_BYTES = 32 * 1024 * 1024  # explicit scoped-VMEM limit, safe on v5e/v6e/v7x


def _weighted_exp_kernel(alpha_ref, x_ref, o_ref):
    # alpha_ref: (1,) f32 in SMEM, holds softplus(weight) precomputed in the wrapper.
    # x_ref / o_ref: (block_m, lane) tiles in VMEM.
    alpha = alpha_ref[0]
    x = x_ref[...]
    y = alpha * jnp.exp(x.astype(jnp.float32))
    o_ref[...] = y.astype(o_ref.dtype)


def _lane_width(total: int) -> int:
    """Widest lane-dense last dim: multiple of 128, prefer >= 512."""
    if total < 512:
        return 128
    for cand in (4096, 2048, 1024, 512):
        if total % cand == 0:
            return cand
    return 512  # ragged total: handled by the pad-and-slice path


@jax.jit
def weighted_exponential(x: jax.Array, weight: jax.Array) -> jax.Array:
    """y = softplus(weight) * exp(x), elementwise. weight has shape (1, 1)."""
    orig_shape = x.shape
    dtype = x.dtype
    itemsize = jnp.dtype(dtype).itemsize
    total = x.size

    # Softplus hoisted out of the kernel: one scalar op in the wrapper instead of
    # exp+log1p + scalar->vector broadcast on every grid step.
    alpha = jax.nn.softplus(weight.astype(jnp.float32)).reshape((1,))

    # Lane-dense flattening.
    lane = _lane_width(total)
    rows = pl.cdiv(total, lane)

    # Tile rows from a VMEM budget: pick the largest tile that keeps
    # double-buffered in+out well inside the scoped VMEM limit on every
    # generation (multiple of 8 sublanes).
    budget_rows = max(8, (_VMEM_TILE_BYTES // (lane * itemsize)) // 8 * 8)
    if rows <= budget_rows:
        block_m = rows          # whole array in one tile (block == full dims is legal)
    else:
        block_m = budget_rows
    grid_m = pl.cdiv(rows, block_m)

    # Pad the flat vector so every tile is fully valid (padding sliced off later).
    rows_padded = grid_m * block_m
    padded_total = rows_padded * lane
    flat = x.reshape(-1)
    if padded_total != total:
        flat = jnp.pad(flat, (0, padded_total - total))
    x2d = flat.reshape(rows_padded, lane)

    cost = pl.CostEstimate(
        flops=total,                          # one multiply per element
        transcendentals=total,                # one exp per element
        bytes_accessed=2 * total * itemsize,  # read + write, no reuse
    )
    out_shape = jax.ShapeDtypeStruct((rows_padded, lane), dtype)

    if grid_m == 1:
        # Tiny / single-tile input: skip the grid & pipelining machinery entirely.
        out = pl.pallas_call(
            _weighted_exp_kernel,
            out_shape=out_shape,
            in_specs=[
                pl.BlockSpec(memory_space=pltpu.MemorySpace.SMEM),   # alpha scalar
                pl.BlockSpec(memory_space=pltpu.MemorySpace.VMEM),   # whole x slab
            ],
            out_specs=pl.BlockSpec(memory_space=pltpu.MemorySpace.VMEM),
            cost_estimate=cost,
            compiler_params=pltpu.CompilerParams(
                vmem_limit_bytes=_VMEM_LIMIT_BYTES,
            ),
        )(alpha, x2d)
    else:
        out = pl.pallas_call(
            _weighted_exp_kernel,
            out_shape=out_shape,
            grid_spec=pltpu.PrefetchScalarGridSpec(
                num_scalar_prefetch=0,
                grid=(grid_m,),
                in_specs=[
                    pl.BlockSpec(memory_space=pltpu.MemorySpace.SMEM),  # alpha scalar
                    pl.BlockSpec((block_m, lane), lambda i: (i, 0)),    # input tile
                ],
                out_specs=pl.BlockSpec((block_m, lane), lambda i: (i, 0)),
            ),
            cost_estimate=cost,
            compiler_params=pltpu.CompilerParams(
                # "parallel" lets v7x shard the grid across its 2 TensorCores;
                # neutral on v5e/v6e (1 TC).
                dimension_semantics=("parallel",),
                vmem_limit_bytes=_VMEM_LIMIT_BYTES,
            ),
        )(alpha, x2d)

    if padded_total != total:
        out = out.reshape(-1)[:total]
    return out.reshape(orig_shape)


def reference(x, weight):
    return jax.nn.softplus(weight[0, 0]) * jnp.exp(x)


if __name__ == "__main__":
    key = jax.random.PRNGKey(0)
    k_x, k_w, k_x2, k_x3 = jax.random.split(key, 4)

    # Deterministic kaiming_uniform_ init for a (1, 1) weight:
    # fan_in = 1, gain = sqrt(2) -> bound = sqrt(6).
    bound = jnp.sqrt(6.0)
    weight = jax.random.uniform(k_w, (1, 1), dtype=jnp.float32,
                                minval=-bound, maxval=bound)

    # Primary (module-consistent) input: NCHW, small shape -> gridless single-block path.
    x = jax.random.normal(k_x, (2, 4, 16, 16), dtype=jnp.float32)
    y = jax.block_until_ready(weighted_exponential(x, weight))
    assert y.shape == x.shape
    assert jnp.allclose(y, reference(x, weight), atol=1e-5, rtol=1e-5), "mismatch (toy)"

    # Larger input exercising the VMEM-budgeted tiled grid path (grid > 1, parallel axis).
    x_big = jax.random.normal(k_x2, (8, 64, 64, 64), dtype=jnp.float32)
    y_big = jax.block_until_ready(weighted_exponential(x_big, weight))
    assert jnp.allclose(y_big, reference(x_big, weight), atol=1e-5, rtol=1e-5), "mismatch (big)"

    # Ragged input exercising the pad-and-slice path.
    x_odd = jax.random.normal(k_x3, (3, 5, 7, 11), dtype=jnp.float32)
    y_odd = jax.block_until_ready(weighted_exponential(x_odd, weight))
    assert jnp.allclose(y_odd, reference(x_odd, weight), atol=1e-5, rtol=1e-5), "mismatch (odd)"

    print("KERNEL_OK")
</pallas_src>

<mosaic_0001>
module attributes {stable_mosaic.version = 11 : i64} {
  func.func @_weighted_exp_kernel(%arg0: memref<1xf32, #tpu.memory_space<smem>>, %arg1: memref<1x2048xf32, #tpu.memory_space<vmem>>, %arg2: memref<1x2048xf32, #tpu.memory_space<vmem>>) attributes {dimension_semantics = [], scalar_prefetch = 0 : i64, scratch_operands = 0 : i64, tpu.core_type = #tpu.core_type<tc>} {
    %c0 = arith.constant 0 : index
    %0 = memref.load %arg0[%c0] : memref<1xf32, #tpu.memory_space<smem>>
    %c0_0 = arith.constant 0 : index
    %c0_1 = arith.constant 0 : index
    %1 = vector.load %arg1[%c0_0, %c0_1] : memref<1x2048xf32, #tpu.memory_space<vmem>>, vector<1x2048xf32>
    %2 = math.exp %1 : vector<1x2048xf32>
    %3 = vector.broadcast %0 : f32 to vector<1x2048xf32>
    %4 = arith.mulf %3, %2 : vector<1x2048xf32>
    %c0_2 = arith.constant 0 : index
    %c0_3 = arith.constant 0 : index
    %5 = vector.load %arg2[%c0_2, %c0_3] : memref<1x2048xf32, #tpu.memory_space<vmem>>, vector<1x2048xf32>
    tpu.vector_store %arg2[%c0_2, %c0_3], %4 {strides = array<i32>} : memref<1x2048xf32, #tpu.memory_space<vmem>>, vector<1x2048xf32>,
    return
  }
}

</mosaic_0001>

<llo_original>
// kernel: weighted_exponential.1
$region0: #{weighted_exponential.1}
  #allocation0 [shape = 'u32[]', space=smem, size = 0x4, offset = 0x4, fixed_abs, tag = 'smem constant byte address 0x4 - core index']
  #allocation1 [shape = 'u32[144,128]{1,0:T(1,128)}', space=vmem, size = 0x12000, scoped, tag = 'internal scratch']
  #allocation2 [shape = 'f32[1]{0:T(128)S(6)}', space=smem, size = 0x200, scoped, tag = 'scoped memory for weighted_exponential.1']
  %s0 = inlined_call_operand.<no memory space> [shape: f32[1], index: 0, kind: input, shape index: {}]
  %s1 = inlined_call_operand.vmem [shape: f32[1,2048], index: 1, kind: input, shape index: {}]
  %s2 = inlined_call_operand.vmem [shape: f32[1,2048], index: 2, kind: output, shape index: {}]
  %s3 = sld [smem:[#allocation0]]
  $region18: #{weighted_exponential.1} parent=0
    _
  %s5 = ssub.s32 1, %s3
  %s6 = scalar_select 0, %s5, %s3
  %7 = sst [smem:[#allocation2]] %s0
  // Predicated region
  $region2: #{weighted_exponential.1} parent=0 // pred_check
    _
  $region3: #{weighted_exponential.1} parent=0 // pred_check_branch
    %9 = sbr.rel (0) target = $region5
  $region4: #{weighted_exponential.1} parent=0 // pred_region
    _
  $region5: #{weighted_exponential.1} parent=0 // pred_fallthru
    _
  // Predicated region
  $region6: #{weighted_exponential.1} parent=0 // pred_check
    _
  $region7: #{weighted_exponential.1} parent=0 // pred_check_branch
    %11 = sbr.rel (0) target = $region9
  $region8: #{weighted_exponential.1} parent=0 // pred_region
    _
  $region9: #{weighted_exponential.1} parent=0 // pred_fallthru
    _
  %s12 = sld [smem:[#allocation2]]
  %v13 = vld [vmem:[%s1] sm:$0xff]
  %v14 = vld [vmem:[%s1 + $0x8] sm:$0xff]
  %v15 = vmul.f32 %v13, 1.442695
  %v16 = vpow.pop %v15
  %v17 = vmul.f32 %v14, 1.442695
  %v18 = vpow.pop %v17
  %v19 = vstv %s12
  %v20 = vmul.f32 %v19, %v16
  %v21 = vmul.f32 %v19, %v18
  %22 = vst [vmem:[%s2] sm:$0xff] %v20
  %23 = vst [vmem:[%s2 + $0x8] sm:$0xff] %v21
  // Predicated region
  $region10: #{weighted_exponential.1} parent=0 // pred_check
    _
  $region11: #{weighted_exponential.1} parent=0 // pred_check_branch
    %25 = sbr.rel (0) target = $region13
  $region12: #{weighted_exponential.1} parent=0 // pred_region
    _
  $region13: #{weighted_exponential.1} parent=0 // pred_fallthru
    _
  // Predicated region
  $region14: #{weighted_exponential.1} parent=0 // pred_check
    _
  $region15: #{weighted_exponential.1} parent=0 // pred_check_branch
    %27 = sbr.rel (0) target = $region17
  $region16: #{weighted_exponential.1} parent=0 // pred_region
    _
  $region17: #{weighted_exponential.1} parent=0 // pred_fallthru
    _

</llo_original>
